<compile_context>
chip_gen: v5e
topology: v5e:2x2
jax: 0.10.0
libtpu: 0.0.40
codegen_flags: <defaults>
</compile_context>

<pallas_src>
import math

import jax
import jax.numpy as jnp
from jax.experimental import pallas as pl
from jax.experimental.pallas import tpu as pltpu


def _pool_out_size(size, k, s, ceil_mode):
    if ceil_mode:
        o = math.ceil((size - k) / s) + 1
        # PyTorch rule: the last window must start inside the input.
        if (o - 1) * s >= size:
            o -= 1
    else:
        o = (size - k) // s + 1
    return o


def _tree_max(vals):
    """Balanced-tree elementwise maximum of a list of equal-shape arrays."""
    while len(vals) > 1:
        nxt = [jnp.maximum(a, b) for a, b in zip(vals[0::2], vals[1::2])]
        if len(vals) % 2:
            nxt.append(vals[-1])
        vals = nxt
    return vals[0]


def _make_maxpool_kernel(H, W, K, S, OH, OW):
    """MaxPool2d(kernel=K, stride=S, ceil_mode=True) over a lane-dense slab.

    x_ref: (H*W,  block_B)  -- image pixels on sublanes, flat batch on lanes
    o_ref: (OH*OW, block_B) -- output pixels on sublanes, flat batch on lanes
    """

    def kernel(x_ref, o_ref):
        out_rows = []
        for oh in range(OH):
            h0 = oh * S
            h1 = min(h0 + K, H)          # clip trailing partial window (ceil_mode)
            for ow in range(OW):
                w0 = ow * S
                w1 = min(w0 + K, W)      # clip trailing partial window (ceil_mode)
                # static zero-cost ref slices -> (1, block_B) row loads
                rows = [x_ref[pl.ds(h * W + w, 1), :]
                        for h in range(h0, h1) for w in range(w0, w1)]
                out_rows.append(_tree_max(rows))
        # Single lane-dense full-block store.
        o_ref[...] = jnp.concatenate(out_rows, axis=0)

    return kernel


def mynn_forward(x, kernel_size=3, stride=None, ceil_mode=True,
                 block_lanes=4096):
    """JAX/Pallas equivalent of Mynn.forward (only maxpool1 is applied)."""
    if stride is None:
        stride = kernel_size
    N, C, H, W = x.shape
    K, S = kernel_size, stride
    OH = _pool_out_size(H, K, S, ceil_mode)
    OW = _pool_out_size(W, K, S, ceil_mode)

    B = N * C
    LANE = 128
    itemsize = jnp.dtype(x.dtype).itemsize

    # Lane-block sizing: a multiple of 128, capped so the double-buffered
    # input+output tiles stay well inside the default scoped-VMEM budget.
    Bp = pl.cdiv(B, LANE) * LANE
    vmem_budget = 8 * 1024 * 1024
    per_lane_bytes = (H * W + OH * OW) * itemsize * 2      # 2x: double buffering
    max_block = max(LANE, (vmem_budget // per_lane_bytes) // LANE * LANE)
    block_lanes = max(LANE, (block_lanes // LANE) * LANE)
    block = min(block_lanes, max_block, Bp)
    Bp = pl.cdiv(Bp, block) * block                        # grid divides evenly

    flat = x.reshape(B, H * W)                    # contiguous -> free reshape
    if Bp != B:
        flat = jnp.pad(flat, ((0, Bp - B), (0, 0)))
    xt = flat.T                                   # (H*W, Bp): batch on lanes

    kern = _make_maxpool_kernel(H, W, K, S, OH, OW)

    out_t = pl.pallas_call(
        kern,
        out_shape=jax.ShapeDtypeStruct((OH * OW, Bp), x.dtype),
        grid_spec=pltpu.PrefetchScalarGridSpec(
            num_scalar_prefetch=0,
            grid=(Bp // block,),
            in_specs=[pl.BlockSpec((H * W, block), lambda i: (0, i))],
            out_specs=pl.BlockSpec((OH * OW, block), lambda i: (0, i)),
        ),
        compiler_params=pltpu.CompilerParams(
            dimension_semantics=("parallel",)),
        cost_estimate=pl.CostEstimate(
            flops=Bp * K * K * OH * OW,
            transcendentals=0,
            bytes_accessed=Bp * (H * W + OH * OW) * itemsize),
    )(xt)

    # Drop lane padding, restore NCHW.
    return out_t[:, :B].T.reshape(N, C, OH, OW)


def _reference_maxpool(x, kernel_size=3, stride=3):
    """Pure-JAX reference for ceil_mode=True max pooling (float inputs)."""
    N, C, H, W = x.shape
    OH = _pool_out_size(H, kernel_size, stride, True)
    OW = _pool_out_size(W, kernel_size, stride, True)
    pad_h = max((OH - 1) * stride + kernel_size - H, 0)
    pad_w = max((OW - 1) * stride + kernel_size - W, 0)
    xp = jnp.pad(x, ((0, 0), (0, 0), (0, pad_h), (0, pad_w)),
                 constant_values=-jnp.inf)
    return jax.lax.reduce_window(
        xp, -jnp.inf, jax.lax.max,
        window_dimensions=(1, 1, kernel_size, kernel_size),
        window_strides=(1, 1, stride, stride),
        padding="VALID",
    )


if __name__ == "__main__":
    key = jax.random.PRNGKey(0)

    # Module reshapes its input to (-1, 1, 5, 5); small case: batch = 2.
    x_small = jax.random.normal(key, (2, 1, 5, 5), dtype=jnp.float32)
    out_small = jax.block_until_ready(mynn_forward(x_small))
    ref_small = _reference_maxpool(x_small)
    assert out_small.shape == (2, 1, 2, 2), out_small.shape
    assert jnp.allclose(out_small, ref_small), (out_small, ref_small)

    # Larger flattened batch exercises the lane grid + padding path.
    x_big = jax.random.normal(jax.random.PRNGKey(0), (300, 1, 5, 5),
                              dtype=jnp.float32)
    out_big = jax.block_until_ready(mynn_forward(x_big, block_lanes=128))
    ref_big = _reference_maxpool(x_big)
    assert out_big.shape == (300, 1, 2, 2), out_big.shape
    assert jnp.allclose(out_big, ref_big)

    print("KERNEL_OK")
</pallas_src>

<mosaic_0001>
module attributes {stable_mosaic.version = 11 : i64} {
  func.func @kernel(%arg0: i32, %arg1: memref<25x128xf32, #tpu.memory_space<vmem>>, %arg2: memref<4x128xf32, #tpu.memory_space<vmem>>) attributes {dimension_semantics = [#tpu.dimension_semantics<parallel>], iteration_bounds = array<i64: 1>, scalar_prefetch = 0 : i64, scratch_operands = 0 : i64, tpu.core_type = #tpu.core_type<tc>, window_params = [{transform_indices = @transform_0, window_bounds = array<i64: 25, 128>}, {transform_indices = @transform_1, window_bounds = array<i64: 4, 128>}]} {
    %c0 = arith.constant 0 : index
    %c0_0 = arith.constant 0 : index
    %0 = vector.load %arg1[%c0, %c0_0] : memref<25x128xf32, #tpu.memory_space<vmem>>, vector<1x128xf32>
    %c1 = arith.constant 1 : index
    %c0_1 = arith.constant 0 : index
    %1 = vector.load %arg1[%c1, %c0_1] : memref<25x128xf32, #tpu.memory_space<vmem>>, vector<1x128xf32>
    %c2 = arith.constant 2 : index
    %c0_2 = arith.constant 0 : index
    %2 = vector.load %arg1[%c2, %c0_2] : memref<25x128xf32, #tpu.memory_space<vmem>>, vector<1x128xf32>
    %c5 = arith.constant 5 : index
    %c0_3 = arith.constant 0 : index
    %3 = vector.load %arg1[%c5, %c0_3] : memref<25x128xf32, #tpu.memory_space<vmem>>, vector<1x128xf32>
    %c6 = arith.constant 6 : index
    %c0_4 = arith.constant 0 : index
    %4 = vector.load %arg1[%c6, %c0_4] : memref<25x128xf32, #tpu.memory_space<vmem>>, vector<1x128xf32>
    %c7 = arith.constant 7 : index
    %c0_5 = arith.constant 0 : index
    %5 = vector.load %arg1[%c7, %c0_5] : memref<25x128xf32, #tpu.memory_space<vmem>>, vector<1x128xf32>
    %c10 = arith.constant 10 : index
    %c0_6 = arith.constant 0 : index
    %6 = vector.load %arg1[%c10, %c0_6] : memref<25x128xf32, #tpu.memory_space<vmem>>, vector<1x128xf32>
    %c11 = arith.constant 11 : index
    %c0_7 = arith.constant 0 : index
    %7 = vector.load %arg1[%c11, %c0_7] : memref<25x128xf32, #tpu.memory_space<vmem>>, vector<1x128xf32>
    %c12 = arith.constant 12 : index
    %c0_8 = arith.constant 0 : index
    %8 = vector.load %arg1[%c12, %c0_8] : memref<25x128xf32, #tpu.memory_space<vmem>>, vector<1x128xf32>
    %9 = arith.maximumf %0, %1 : vector<1x128xf32>
    %10 = arith.maximumf %2, %3 : vector<1x128xf32>
    %11 = arith.maximumf %4, %5 : vector<1x128xf32>
    %12 = arith.maximumf %6, %7 : vector<1x128xf32>
    %13 = arith.maximumf %9, %10 : vector<1x128xf32>
    %14 = arith.maximumf %11, %12 : vector<1x128xf32>
    %15 = arith.maximumf %13, %14 : vector<1x128xf32>
    %16 = arith.maximumf %15, %8 : vector<1x128xf32>
    %c3 = arith.constant 3 : index
    %c0_9 = arith.constant 0 : index
    %17 = vector.load %arg1[%c3, %c0_9] : memref<25x128xf32, #tpu.memory_space<vmem>>, vector<1x128xf32>
    %c4 = arith.constant 4 : index
    %c0_10 = arith.constant 0 : index
    %18 = vector.load %arg1[%c4, %c0_10] : memref<25x128xf32, #tpu.memory_space<vmem>>, vector<1x128xf32>
    %c8 = arith.constant 8 : index
    %c0_11 = arith.constant 0 : index
    %19 = vector.load %arg1[%c8, %c0_11] : memref<25x128xf32, #tpu.memory_space<vmem>>, vector<1x128xf32>
    %c9 = arith.constant 9 : index
    %c0_12 = arith.constant 0 : index
    %20 = vector.load %arg1[%c9, %c0_12] : memref<25x128xf32, #tpu.memory_space<vmem>>, vector<1x128xf32>
    %c13 = arith.constant 13 : index
    %c0_13 = arith.constant 0 : index
    %21 = vector.load %arg1[%c13, %c0_13] : memref<25x128xf32, #tpu.memory_space<vmem>>, vector<1x128xf32>
    %c14 = arith.constant 14 : index
    %c0_14 = arith.constant 0 : index
    %22 = vector.load %arg1[%c14, %c0_14] : memref<25x128xf32, #tpu.memory_space<vmem>>, vector<1x128xf32>
    %23 = arith.maximumf %17, %18 : vector<1x128xf32>
    %24 = arith.maximumf %19, %20 : vector<1x128xf32>
    %25 = arith.maximumf %21, %22 : vector<1x128xf32>
    %26 = arith.maximumf %23, %24 : vector<1x128xf32>
    %27 = arith.maximumf %26, %25 : vector<1x128xf32>
    %c15 = arith.constant 15 : index
    %c0_15 = arith.constant 0 : index
    %28 = vector.load %arg1[%c15, %c0_15] : memref<25x128xf32, #tpu.memory_space<vmem>>, vector<1x128xf32>
    %c16 = arith.constant 16 : index
    %c0_16 = arith.constant 0 : index
    %29 = vector.load %arg1[%c16, %c0_16] : memref<25x128xf32, #tpu.memory_space<vmem>>, vector<1x128xf32>
    %c17 = arith.constant 17 : index
    %c0_17 = arith.constant 0 : index
    %30 = vector.load %arg1[%c17, %c0_17] : memref<25x128xf32, #tpu.memory_space<vmem>>, vector<1x128xf32>
    %c20 = arith.constant 20 : index
    %c0_18 = arith.constant 0 : index
    %31 = vector.load %arg1[%c20, %c0_18] : memref<25x128xf32, #tpu.memory_space<vmem>>, vector<1x128xf32>
    %c21 = arith.constant 21 : index
    %c0_19 = arith.constant 0 : index
    %32 = vector.load %arg1[%c21, %c0_19] : memref<25x128xf32, #tpu.memory_space<vmem>>, vector<1x128xf32>
    %c22 = arith.constant 22 : index
    %c0_20 = arith.constant 0 : index
    %33 = vector.load %arg1[%c22, %c0_20] : memref<25x128xf32, #tpu.memory_space<vmem>>, vector<1x128xf32>
    %34 = arith.maximumf %28, %29 : vector<1x128xf32>
    %35 = arith.maximumf %30, %31 : vector<1x128xf32>
    %36 = arith.maximumf %32, %33 : vector<1x128xf32>
    %37 = arith.maximumf %34, %35 : vector<1x128xf32>
    %38 = arith.maximumf %37, %36 : vector<1x128xf32>
    %c18 = arith.constant 18 : index
    %c0_21 = arith.constant 0 : index
    %39 = vector.load %arg1[%c18, %c0_21] : memref<25x128xf32, #tpu.memory_space<vmem>>, vector<1x128xf32>
    %c19 = arith.constant 19 : index
    %c0_22 = arith.constant 0 : index
    %40 = vector.load %arg1[%c19, %c0_22] : memref<25x128xf32, #tpu.memory_space<vmem>>, vector<1x128xf32>
    %c23 = arith.constant 23 : index
    %c0_23 = arith.constant 0 : index
    %41 = vector.load %arg1[%c23, %c0_23] : memref<25x128xf32, #tpu.memory_space<vmem>>, vector<1x128xf32>
    %c24 = arith.constant 24 : index
    %c0_24 = arith.constant 0 : index
    %42 = vector.load %arg1[%c24, %c0_24] : memref<25x128xf32, #tpu.memory_space<vmem>>, vector<1x128xf32>
    %43 = arith.maximumf %39, %40 : vector<1x128xf32>
    %44 = arith.maximumf %41, %42 : vector<1x128xf32>
    %45 = arith.maximumf %43, %44 : vector<1x128xf32>
    %46 = tpu.concatenate %16, %27, %38, %45 in 0 : vector<1x128xf32>, vector<1x128xf32>, vector<1x128xf32>, vector<1x128xf32> -> vector<4x128xf32>
    %c0_25 = arith.constant 0 : index
    %c0_26 = arith.constant 0 : index
    %47 = vector.load %arg2[%c0_25, %c0_26] : memref<4x128xf32, #tpu.memory_space<vmem>>, vector<4x128xf32>
    tpu.vector_store %arg2[%c0_25, %c0_26], %46 {strides = array<i32>} : memref<4x128xf32, #tpu.memory_space<vmem>>, vector<4x128xf32>,
    return
  }
  func.func @transform_0(%arg0: i32) -> (i32, i32) {
    %c0_i32 = arith.constant 0 : i32
    %c0_i32_0 = arith.constant 0 : i32
    return %c0_i32, %arg0 : i32, i32
  }
  func.func @transform_1(%arg0: i32) -> (i32, i32) {
    %c0_i32 = arith.constant 0 : i32
    %c0_i32_0 = arith.constant 0 : i32
    return %c0_i32, %arg0 : i32, i32
  }
}

</mosaic_0001>

<llo_original>
// kernel: tpu_custom_call.1
$region0: #{tpu_custom_call.1}
  #allocation0 [shape = 'u32[]', space=smem, size = 0x4, offset = 0x4, fixed_abs, tag = 'smem constant byte address 0x4 - core index']
  #allocation1 [shape = 'u32[72,128]{1,0:T(1,128)}', space=vmem, size = 0x9000, scoped, tag = 'internal scratch']
  %s0 = inlined_call_operand.hbm [shape: f32[25,128], index: 0, kind: input, shape index: {}]
  %s1 = inlined_call_operand.hbm [shape: f32[4,128], index: 1, kind: output, shape index: {}]
  %s2 = sld [smem:[#allocation0]]
  $region18: #{tpu_custom_call.1} parent=0
    _
  %s4 = ssub.s32 1, %s2
  %s5 = scalar_select 0, %s4, %s2
  $region1: #{tpu_custom_call.1} parent=0
    #allocation2 [shape = 'u8[16384]{0}', space=vmem, size = 0x4000, scoped, tag = 'input window, operand 0, single buffered']
    #allocation3 [shape = 's32[1]{0}', space=sflag, size = 0x4, scoped, tag = 'scoped memory for tpu_custom_call.1']
    #allocation4 [shape = 's32[1]{0}', space=sflag, size = 0x4, scoped, tag = 'scoped memory for tpu_custom_call.1']
    #allocation5 [shape = 'u8[2048]{0}', space=vmem, size = 0x800, scoped, tag = 'output window, operand 0, single buffered']
    %6 = vsyncpa [#allocation3], 0
    %7 = vsyncpa [#allocation4], 0
    // Predicated region
    $region2: #{tpu_custom_call.1} parent=1 // pred_check
      _
    $region3: #{tpu_custom_call.1} parent=1 // pred_check_branch
      %9 = sbr.rel (0) target = $region5
    $region4: #{tpu_custom_call.1} parent=1 // pred_region
      %11 = vsyncadd [#allocation3], 0
      %s12 = sshll.u32 %s0, 4
      %s13 = int_to_ptr.hbm [resolvable:$true] %s12
      %s14 = sshll.u32 [#allocation2], 4
      %s15 = int_to_ptr.vmem [resolvable:$true] %s14
      %20 = dma.hbm_to_vmem [thread:$0]  %s13, 512, %s15, [#allocation3], 128, 128, 8
    $region5: #{tpu_custom_call.1} parent=1 // pred_fallthru
      _
    // Predicated region
    $region6: #{tpu_custom_call.1} parent=1 // pred_check
      _
    $region7: #{tpu_custom_call.1} parent=1 // pred_check_branch
      %22 = sbr.rel (0) target = $region9
    $region8: #{tpu_custom_call.1} parent=1 // pred_region
      %24 = dma.done [#allocation3], 512
    $region9: #{tpu_custom_call.1} parent=1 // pred_fallthru
      _
    %v25 = vld [vmem:[#allocation2] sm:$0x1]
    %v26 = vld [vmem:[#allocation2 + $0x1] sm:$0x1]
    %v27 = vld [vmem:[#allocation2 + $0x2] sm:$0x1]
    %v28 = vld [vmem:[#allocation2 + $0x5] sm:$0x1]
    %v29 = vld [vmem:[#allocation2 + $0x6] sm:$0x1]
    %v30 = vld [vmem:[#allocation2 + $0x7] sm:$0x1]
    %v31 = vld [vmem:[#allocation2 + $0xa] sm:$0x1]
    %v32 = vld [vmem:[#allocation2 + $0xb] sm:$0x1]
    %v33 = vld [vmem:[#allocation2 + $0xc] sm:$0x1]
    %v34 = vmax.f32 %v25, %v26
    %v35 = vmax.f32 %v27, %v28
    %v36 = vmax.f32 %v29, %v30
    %v37 = vmax.f32 %v31, %v32
    %v38 = vmax.f32 %v34, %v35
    %v39 = vmax.f32 %v36, %v37
    %v40 = vmax.f32 %v38, %v39
    %v41 = vmax.f32 %v40, %v33
    %v42 = vld [vmem:[#allocation2 + $0x3] sm:$0x1]
    %v43 = vld [vmem:[#allocation2 + $0x4] sm:$0x1]
    %v44 = vld [vmem:[#allocation2 + $0x8] sm:$0x1]
    %v45 = vld [vmem:[#allocation2 + $0x9] sm:$0x1]
    %v46 = vld [vmem:[#allocation2 + $0xd] sm:$0x1]
    %v47 = vld [vmem:[#allocation2 + $0xe] sm:$0x1]
    %v48 = vmax.f32 %v42, %v43
    %v49 = vmax.f32 %v44, %v45
    %v50 = vmax.f32 %v46, %v47
    %v51 = vmax.f32 %v48, %v49
    %v52 = vmax.f32 %v51, %v50
    %v53 = vld [vmem:[#allocation2 + $0xf] sm:$0x1]
    %v54 = vld [vmem:[#allocation2 + $0x10] sm:$0x1]
    %v55 = vld [vmem:[#allocation2 + $0x11] sm:$0x1]
    %v56 = vld [vmem:[#allocation2 + $0x14] sm:$0x1]
    %v57 = vld [vmem:[#allocation2 + $0x15] sm:$0x1]
    %v58 = vld [vmem:[#allocation2 + $0x16] sm:$0x1]
    %v59 = vmax.f32 %v53, %v54
    %v60 = vmax.f32 %v55, %v56
    %v61 = vmax.f32 %v57, %v58
    %v62 = vmax.f32 %v59, %v60
    %v63 = vmax.f32 %v62, %v61
    %v64 = vld [vmem:[#allocation2 + $0x12] sm:$0x1]
    %v65 = vld [vmem:[#allocation2 + $0x13] sm:$0x1]
    %v66 = vld [vmem:[#allocation2 + $0x17] sm:$0x1]
    %v67 = vld [vmem:[#allocation2 + $0x18] sm:$0x1]
    %v68 = vmax.f32 %v64, %v65
    %v69 = vmax.f32 %v66, %v67
    %v70 = vmax.f32 %v68, %v69
    %v72 = vrot.slane %v52, 7
    %v75 = vrot.slane %v63, 6
    %v78 = vrot.slane %v70, 5
    %vm80 = vcmask 1040384
    %v81 = vsel %vm80, %v41, %v72
    %vm82 = vcmask 1041408
    %v83 = vsel %vm82, %v81, %v75
    %vm84 = vcmask 1042432
    %v85 = vsel %vm84, %v83, %v78
    %86 = vst [vmem:[#allocation5] sm:$0xf] %v85
    // Predicated region
    $region10: #{tpu_custom_call.1} parent=1 // pred_check
      _
    $region11: #{tpu_custom_call.1} parent=1 // pred_check_branch
      %88 = sbr.rel (0) target = $region13
    $region12: #{tpu_custom_call.1} parent=1 // pred_region
      %90 = vsyncadd [#allocation4], 0
      %s92 = sshll.u32 [#allocation5], 4
      %s93 = int_to_ptr.vmem [resolvable:$true] %s92
      %s94 = sshll.u32 %s1, 4
      %s95 = int_to_ptr.hbm [resolvable:$true] %s94
      %97 = dma.vmem_to_hbm [thread:$0]  %s93, 64, %s95, [#allocation4]
    $region13: #{tpu_custom_call.1} parent=1 // pred_fallthru
      _
    // Predicated region
    $region14: #{tpu_custom_call.1} parent=1 // pred_check
      _
    $region15: #{tpu_custom_call.1} parent=1 // pred_check_branch
      %99 = sbr.rel (0) target = $region17
    $region16: #{tpu_custom_call.1} parent=1 // pred_region
      %101 = dma.done [#allocation4], 64
    $region17: #{tpu_custom_call.1} parent=1 // pred_fallthru
      _
    %102 = vsyncpa [#allocation3], 1
    %103 = vsyncpa [#allocation4], 1

</llo_original>
